<compile_context>
chip_gen: v7x
topology: tpu7x:2x2x1
jax: 0.10.0
libtpu: 0.0.40
codegen_flags: <defaults>
</compile_context>

<pallas_src>
import jax
import jax.numpy as jnp
import numpy as np
from jax.experimental import pallas as pl
from jax.experimental.pallas import tpu as pltpu


def _vmem_capacity_bytes():
    """Physical VMEM per core, with a conservative fallback (v7x = 64 MiB)."""
    try:
        return int(pltpu.get_tpu_info().vmem_capacity_bytes)
    except Exception:
        return 64 << 20


# ---------------------------------------------------------------------------
# Kernel 1: streaming masked reductions over the sequence axis (MXU matmul).
# ---------------------------------------------------------------------------
def _stream_reduce_kernel(mask_ref, out_ref, feat_ref):
    s = pl.program_id(1)

    @pl.when(s == 0)
    def _init():
        feat_ref[...] = jnp.zeros_like(feat_ref)

    # mask tile [4, tile_s] @ hidden tile [tile_s, H] -> [4, H], f32 acc.
    # Rows: 0 = CLS one-hot, 1 = arg1 mask, 2 = arg2 mask, 3 = zeros.
    feat_ref[...] += jnp.dot(mask_ref[...], out_ref[...],
                             preferred_element_type=jnp.float32)

    @pl.when(s == pl.num_programs(1) - 1)
    def _epilogue():
        # Row 3 of the accumulator is still zero (zero mask row); overwrite it
        # with the elementwise product feature arg1_vec * arg2_vec.
        feat_ref[3:4, :] = feat_ref[1:2, :] * feat_ref[2:3, :]


# ---------------------------------------------------------------------------
# Kernel 2: one-shot batched scoring MLP ([B,4H] -> [B,H] -> [B,128] -> [B,1]).
# ---------------------------------------------------------------------------
def _mlp_kernel(x_ref, w1_ref, b1_ref, w2_ref, b2_ref, w3_ref, b3_ref, o_ref):
    h1 = jnp.dot(x_ref[...], w1_ref[...], preferred_element_type=jnp.float32)
    h1 = jnp.maximum(h1 + b1_ref[...], 0.0)
    h2 = jnp.dot(h1, w2_ref[...], preferred_element_type=jnp.float32)
    h2 = jnp.maximum(h2 + b2_ref[...], 0.0)
    out = jnp.dot(h2, w3_ref[...], preferred_element_type=jnp.float32) + b3_ref[...]
    o_ref[...] = out.astype(o_ref.dtype)


def full_cross_encoder_head(output, arg1, arg2, w1, b1, w2, b2, w3, b3,
                            *, tile_s=None):
    """output: [B,S,H] encoder hidden states (f32 or bf16); arg1/arg2: [B,S];
    weights pre-transposed [in,out]; biases [1,out].  Returns [B,1] f32."""
    B, S, H = output.shape
    elt = jnp.dtype(output.dtype).itemsize
    cap = _vmem_capacity_bytes()

    # ---- sequence tiling: lane/sublane aligned, default 1024 rows ----
    if tile_s is None:
        tile_s = 1024
    tile_s = int(tile_s)
    if tile_s >= S:
        tile_s, n_tiles = S, 1
    else:
        tile_s = max(128, ((tile_s + 127) // 128) * 128)   # mask lane / hidden sublane alignment
        if tile_s >= S:
            tile_s, n_tiles = S, 1
        else:
            n_tiles = -(-S // tile_s)
    s_pad = n_tiles * tile_s

    if s_pad != S:
        pad = s_pad - S
        output = jnp.pad(output, ((0, 0), (0, pad), (0, 0)))
        arg1 = jnp.pad(arg1, ((0, 0), (0, pad)))
        arg2 = jnp.pad(arg2, ((0, 0), (0, pad)))

    # ---- stacked, lane-dense masks [B, 4, S_pad] in the hidden-state dtype ----
    mdt = output.dtype
    cls_row = jnp.broadcast_to(
        (jnp.arange(s_pad) == 0).astype(mdt)[None, None, :], (B, 1, s_pad))
    masks = jnp.concatenate(
        [cls_row,
         arg1.astype(mdt)[:, None, :],
         arg2.astype(mdt)[:, None, :],
         jnp.zeros((B, 1, s_pad), mdt)],
        axis=1)

    # ---- VMEM budget for the streaming kernel (no resident weights) ----
    stream_bytes = (2 * tile_s * H * elt        # double-buffered hidden tile
                    + 2 * 8 * tile_s * elt      # double-buffered mask tile (4 -> 8 sublanes)
                    + 2 * 8 * H * 4)            # resident [4,H] f32 accumulator block
    vmem1 = int(min(int(0.9 * cap), max(32 << 20, 2 * stream_bytes + (2 << 20))))

    vecs = pl.pallas_call(
        _stream_reduce_kernel,
        out_shape=jax.ShapeDtypeStruct((B, 4, H), jnp.float32),
        grid=(B, n_tiles),
        in_specs=[
            pl.BlockSpec((None, 4, tile_s), lambda b, s: (b, 0, s)),
            pl.BlockSpec((None, tile_s, H), lambda b, s: (b, s, 0)),
        ],
        out_specs=pl.BlockSpec((None, 4, H), lambda b, s: (b, 0, 0)),
        compiler_params=pltpu.CompilerParams(
            dimension_semantics=("parallel", "arbitrary"),
            vmem_limit_bytes=vmem1,
        ),
        cost_estimate=pl.CostEstimate(
            flops=int(2 * B * s_pad * H * 4),
            transcendentals=0,
            bytes_accessed=int(B * s_pad * H * elt + B * 4 * s_pad * elt
                               + B * 4 * H * 4),
        ),
    )(masks, output)

    # [B, 4, H] -> [B, 4H]; row order matches torch.cat([cls, a1, a2, a1*a2], 1).
    feat = vecs.reshape(B, 4 * H)

    # ---- one-shot batched MLP (weights live only in this tiny kernel) ----
    param_bytes = sum(int(np.prod(p.shape)) * jnp.dtype(p.dtype).itemsize
                      for p in (w1, b1, w2, b2, w3, b3))
    vmem2 = int(min(int(0.9 * cap),
                    max(32 << 20, 2 * param_bytes + 2 * B * 4 * H * 4 + (2 << 20))))

    scores = pl.pallas_call(
        _mlp_kernel,
        out_shape=jax.ShapeDtypeStruct((B, 1), jnp.float32),
        compiler_params=pltpu.CompilerParams(vmem_limit_bytes=vmem2),
    )(feat, w1, b1, w2, b2, w3, b3)

    return scores


# ---------------------------------------------------------------------------
# Test harness
# ---------------------------------------------------------------------------
def _xavier_uniform(key, fan_in, fan_out):
    # matches nn.init.xavier_uniform_ bound; stored as [in, out] (transposed).
    bound = float(np.sqrt(6.0 / (fan_in + fan_out)))
    return jax.random.uniform(key, (fan_in, fan_out), jnp.float32, -bound, bound)


def _reference(output, arg1, arg2, w1, b1, w2, b2, w3, b3):
    """float64 numpy reference of the scoring head."""
    out = np.asarray(output.astype(jnp.float32), dtype=np.float64)
    a1 = np.asarray(arg1, dtype=np.float64)[:, :, None]
    a2 = np.asarray(arg2, dtype=np.float64)[:, :, None]
    arg1_vec = (out * a1).sum(1)
    arg2_vec = (out * a2).sum(1)
    cls_vec = out[:, 0, :]
    feat = np.concatenate([cls_vec, arg1_vec, arg2_vec, arg1_vec * arg2_vec], axis=1)
    h1 = np.maximum(feat @ np.asarray(w1, np.float64) + np.asarray(b1, np.float64), 0.0)
    h2 = np.maximum(h1 @ np.asarray(w2, np.float64) + np.asarray(b2, np.float64), 0.0)
    return h2 @ np.asarray(w3, np.float64) + np.asarray(b3, np.float64)


def _run_case(key, B, S, H, tile_s, dtype, rtol, atol):
    k_out, k_a1, k_a2, kw1, kb1, kw2, kb2, kw3, kb3 = jax.random.split(key, 9)

    # synthetic encoder hidden states + binary arg masks (like PyTorch usage)
    output = jax.random.normal(k_out, (B, S, H), jnp.float32).astype(dtype)
    arg1 = (jax.random.uniform(k_a1, (B, S)) < 0.3).astype(jnp.float32)
    arg2 = (jax.random.uniform(k_a2, (B, S)) < 0.3).astype(jnp.float32)

    # head params (long=True): Linear(4H,H)->ReLU->Linear(H,128)->ReLU->Linear(128,1)
    w1 = _xavier_uniform(kw1, 4 * H, H)
    b1 = jax.random.uniform(kb1, (1, H), jnp.float32)        # nn.init.uniform_ ~ U[0,1)
    w2 = _xavier_uniform(kw2, H, 128)
    b2 = jax.random.uniform(kb2, (1, 128), jnp.float32)
    w3 = _xavier_uniform(kw3, 128, 1)
    b3 = jax.random.uniform(kb3, (1, 1), jnp.float32)

    scores = full_cross_encoder_head(output, arg1, arg2, w1, b1, w2, b2, w3, b3,
                                     tile_s=tile_s)
    scores = jax.block_until_ready(scores)

    ref = _reference(output, arg1, arg2, w1, b1, w2, b2, w3, b3)
    np.testing.assert_allclose(np.asarray(scores, np.float64), ref,
                               rtol=rtol, atol=atol)


if __name__ == "__main__":
    key = jax.random.PRNGKey(0)
    k1, k2, k3 = jax.random.split(key, 3)

    # Single-tile f32 case (B=2, S=8, H=32).
    _run_case(k1, B=2, S=8, H=32, tile_s=None, dtype=jnp.float32,
              rtol=1e-3, atol=1e-3)
    # Multi-tile f32 case with sequence padding (S=300 -> 3 tiles of 128):
    # exercises accumulator init / epilogue gating and zero-padded mask rows.
    _run_case(k2, B=2, S=300, H=32, tile_s=128, dtype=jnp.float32,
              rtol=1e-3, atol=1e-3)
    # bf16 hidden states (production path): fed straight to the MXU with f32
    # accumulation; the reference uses the same bf16-rounded inputs.
    _run_case(k3, B=2, S=300, H=32, tile_s=128, dtype=jnp.bfloat16,
              rtol=3e-2, atol=3e-2)

    print("KERNEL_OK")
</pallas_src>

<mosaic_0001>
module attributes {stable_mosaic.version = 11 : i64} {
  func.func @_stream_reduce_kernel(%arg0: i32, %arg1: i32, %arg2: memref<1x4x8xf32, #tpu.memory_space<vmem>>, %arg3: memref<1x8x32xf32, #tpu.memory_space<vmem>>, %arg4: memref<1x4x32xf32, #tpu.memory_space<vmem>>) attributes {dimension_semantics = [#tpu.dimension_semantics<parallel>, #tpu.dimension_semantics<arbitrary>], iteration_bounds = array<i64: 2, 1>, scalar_prefetch = 0 : i64, scratch_operands = 0 : i64, tpu.core_type = #tpu.core_type<tc>, window_params = [{transform_indices = @transform_0, window_bounds = array<i64: 1, 4, 8>}, {transform_indices = @transform_1, window_bounds = array<i64: 1, 8, 32>}, {transform_indices = @transform_2, window_bounds = array<i64: 1, 4, 32>}]} {
    %c0_i32 = arith.constant 0 : i32
    %0 = arith.cmpi eq, %arg1, %c0_i32 : i32
    %1 = arith.extui %0 : i1 to i32
    %c0_i32_0 = arith.constant 0 : i32
    %2 = arith.cmpi ne, %1, %c0_i32_0 : i32
    scf.if %2 {
      %cst_14 = arith.constant 0.000000e+00 : f32
      %17 = vector.broadcast %cst_14 : f32 to vector<4x32xf32>
      %c0_15 = arith.constant 0 : index
      %c0_16 = arith.constant 0 : index
      %c0_17 = arith.constant 0 : index
      %18 = vector.load %arg4[%c0_15, %c0_16, %c0_17] : memref<1x4x32xf32, #tpu.memory_space<vmem>>, vector<1x4x32xf32>
      %19 = vector.shape_cast %18 : vector<1x4x32xf32> to vector<4x32xf32>
      %20 = vector.shape_cast %17 : vector<4x32xf32> to vector<1x4x32xf32>
      tpu.vector_store %arg4[%c0_15, %c0_16, %c0_17], %20 {strides = array<i32>} : memref<1x4x32xf32, #tpu.memory_space<vmem>>, vector<1x4x32xf32>,
    } else {
    }
    %c0 = arith.constant 0 : index
    %c0_1 = arith.constant 0 : index
    %c0_2 = arith.constant 0 : index
    %3 = vector.load %arg4[%c0, %c0_1, %c0_2] : memref<1x4x32xf32, #tpu.memory_space<vmem>>, vector<1x4x32xf32>
    %4 = vector.shape_cast %3 : vector<1x4x32xf32> to vector<4x32xf32>
    %c0_3 = arith.constant 0 : index
    %c0_4 = arith.constant 0 : index
    %c0_5 = arith.constant 0 : index
    %5 = vector.load %arg2[%c0_3, %c0_4, %c0_5] : memref<1x4x8xf32, #tpu.memory_space<vmem>>, vector<1x4x8xf32>
    %6 = vector.shape_cast %5 : vector<1x4x8xf32> to vector<4x8xf32>
    %c0_6 = arith.constant 0 : index
    %c0_7 = arith.constant 0 : index
    %c0_8 = arith.constant 0 : index
    %7 = vector.load %arg3[%c0_6, %c0_7, %c0_8] : memref<1x8x32xf32, #tpu.memory_space<vmem>>, vector<1x8x32xf32>
    %8 = vector.shape_cast %7 : vector<1x8x32xf32> to vector<8x32xf32>
    %cst = arith.constant dense<0.000000e+00> : vector<4x32xf32>
    %9 = tpu.matmul %6, %8, %cst {dimension_numbers = #tpu.dot_dimension_numbers<[1], [0], [0], [1], [0, 0, 1, 1], [], []>} : vector<4x8xf32>, vector<8x32xf32>, vector<4x32xf32> -> vector<4x32xf32>
    %10 = arith.addf %4, %9 : vector<4x32xf32>
    %c0_9 = arith.constant 0 : index
    %c0_10 = arith.constant 0 : index
    %c0_11 = arith.constant 0 : index
    %11 = vector.load %arg4[%c0_9, %c0_10, %c0_11] : memref<1x4x32xf32, #tpu.memory_space<vmem>>, vector<1x4x32xf32>
    %12 = vector.shape_cast %11 : vector<1x4x32xf32> to vector<4x32xf32>
    %13 = vector.shape_cast %10 : vector<4x32xf32> to vector<1x4x32xf32>
    tpu.vector_store %arg4[%c0_9, %c0_10, %c0_11], %13 {strides = array<i32>} : memref<1x4x32xf32, #tpu.memory_space<vmem>>, vector<1x4x32xf32>,
    %c0_i32_12 = arith.constant 0 : i32
    %14 = arith.cmpi eq, %arg1, %c0_i32_12 : i32
    %15 = arith.extui %14 : i1 to i32
    %c0_i32_13 = arith.constant 0 : i32
    %16 = arith.cmpi ne, %15, %c0_i32_13 : i32
    scf.if %16 {
      %c0_14 = arith.constant 0 : index
      %c1 = arith.constant 1 : index
      %c0_15 = arith.constant 0 : index
      %17 = vector.load %arg4[%c0_14, %c1, %c0_15] : memref<1x4x32xf32, #tpu.memory_space<vmem>>, vector<1x1x32xf32>
      %18 = vector.shape_cast %17 : vector<1x1x32xf32> to vector<1x32xf32>
      %c0_16 = arith.constant 0 : index
      %c2 = arith.constant 2 : index
      %c0_17 = arith.constant 0 : index
      %19 = vector.load %arg4[%c0_16, %c2, %c0_17] : memref<1x4x32xf32, #tpu.memory_space<vmem>>, vector<1x1x32xf32>
      %20 = vector.shape_cast %19 : vector<1x1x32xf32> to vector<1x32xf32>
      %21 = arith.mulf %18, %20 : vector<1x32xf32>
      %c0_18 = arith.constant 0 : index
      %c3 = arith.constant 3 : index
      %c0_19 = arith.constant 0 : index
      %22 = vector.load %arg4[%c0_18, %c3, %c0_19] : memref<1x4x32xf32, #tpu.memory_space<vmem>>, vector<1x1x32xf32>
      %23 = vector.shape_cast %22 : vector<1x1x32xf32> to vector<1x32xf32>
      %24 = vector.shape_cast %21 : vector<1x32xf32> to vector<1x1x32xf32>
      tpu.vector_store %arg4[%c0_18, %c3, %c0_19], %24 {strides = array<i32>} : memref<1x4x32xf32, #tpu.memory_space<vmem>>, vector<1x1x32xf32>,
    } else {
    }
    return
  }
  func.func @transform_0(%arg0: i32, %arg1: i32) -> (i32, i32, i32) {
    %c0_i32 = arith.constant 0 : i32
    %c0_i32_0 = arith.constant 0 : i32
    return %arg0, %c0_i32, %arg1 : i32, i32, i32
  }
  func.func @transform_1(%arg0: i32, %arg1: i32) -> (i32, i32, i32) {
    %c0_i32 = arith.constant 0 : i32
    %c0_i32_0 = arith.constant 0 : i32
    return %arg0, %arg1, %c0_i32 : i32, i32, i32
  }
  func.func @transform_2(%arg0: i32, %arg1: i32) -> (i32, i32, i32) {
    %c0_i32 = arith.constant 0 : i32
    %c0_i32_0 = arith.constant 0 : i32
    %c0_i32_1 = arith.constant 0 : i32
    return %arg0, %c0_i32, %c0_i32_0 : i32, i32, i32
  }
}

</mosaic_0001>

<llo_original>
// kernel: tpu_custom_call.1
$region0: #{tpu_custom_call.1}
  #allocation0 [shape = 'u32[]', space=smem, size = 0x4, offset = 0x4, fixed_abs, tag = 'smem constant byte address 0x4 - core index']
  #allocation1 [shape = 'u32[144,128]{1,0:T(1,128)}', space=vmem, size = 0x12000, scoped, tag = 'internal scratch']
  %s0 = inlined_call_operand.hbm [shape: f32[2,4,8], index: 0, kind: input, shape index: {}]
  %s1 = inlined_call_operand.hbm [shape: f32[2,8,32], index: 1, kind: input, shape index: {}]
  %s2 = inlined_call_operand.hbm [shape: f32[2,4,32], index: 2, kind: output, shape index: {}]
  %s3 = sld [smem:[#allocation0]]
  $region57: #{tpu_custom_call.1} parent=0
    _
  %s5 = ssub.s32 1, %s3
  %s6 = scalar_select 0, %s5, %s3
  $region1: #{tpu_custom_call.1} parent=0
    #allocation2 [shape = 'u8[4096]{0}', space=vmem, size = 0x1000, scoped, tag = 'input window, operand 0']
    #allocation3 [shape = 's32[2]{0}', space=sflag, size = 0x8, scoped, tag = 'scoped memory for tpu_custom_call.1']
    #allocation4 [shape = 's32[2]{0}', space=sflag, size = 0x8, scoped, tag = 'scoped memory for tpu_custom_call.1']
    #allocation5 [shape = 'u8[8192]{0}', space=vmem, size = 0x2000, scoped, tag = 'input window, operand 1']
    #allocation6 [shape = 's32[2]{0}', space=sflag, size = 0x8, scoped, tag = 'scoped memory for tpu_custom_call.1']
    #allocation7 [shape = 'u8[4096]{0}', space=vmem, size = 0x1000, scoped, tag = 'output window, operand 0']
    %7 = vsyncpa [#allocation3], 0
    %s8 = scalar_lea.sflag [#allocation3], 1
    %9 = vsyncpa %s8, 0
    %10 = vsyncpa [#allocation6], 0
    %s11 = scalar_lea.sflag [#allocation6], 1
    %12 = vsyncpa %s11, 0
    %13 = vsyncpa [#allocation4], 0
    %s14 = scalar_lea.sflag [#allocation4], 1
    %15 = vsyncpa %s14, 0
    loop: start=0, step=1, limit=4
    $region2: #{tpu_custom_call.1} parent=1 // loop_pre_header
      _
    $region3: #{tpu_custom_call.1} parent=1 // loop_header
      %s17 = sphi 0, %s21
      %p18 = scmp.ge.s32.totalorder %s17, 4
      %s24 = sphi 0, %s36
      %s25 = sphi 0, %s32
      %s26 = sphi 0, %s24
      %s27 = sphi 0, %s25
      %s28 = sphi 0, %s26
      %s29 = sphi 0, %s27
      %s41 = sphi 0, %s43
      %s44 = sphi 0, %s41
      %s45 = sphi 0, %s44
      %s61 = sphi 0, %s45
      %s69 = sphi 0, %s71
      %s72 = sphi 0, %s69
      %s73 = sphi 0, %s72
      %s89 = sphi 0, %s73
      %s95 = sphi 0, %s97
      %s98 = sphi 0, %s95
      %s99 = sphi 0, %s98
      %s115 = sphi 0, %s99
    $region4: #{tpu_custom_call.1} parent=1 // loop_header_branch
      %20 = sbr.rel (%p18) target = $region8
    $region5: #{tpu_custom_call.1} parent=1 // loop_body
      %s22 = ssub.s32 %s17, 1
      %s23 = ssub.s32 %s17, 2
      %s30 = sadd.s32 1, %s25
      %p31 = scmp.ge.s32.totalorder %s30, 1
      %s32 = scalar_select %p31, 0, %s30
      %s33 = sadd.s32 1, %s24
      %s34 = scalar_select %p31, %s33, %s24
      %p35 = scmp.ge.s32.totalorder %s34, 2
      %s36 = scalar_select %p35, 0, %s34
      %s37 = ssub.s32 %s24, %s36
      %s38 = ssub.s32 %s25, %s32
      %s39 = sor.u32 %s37, %s38
      %p40 = scmp.eq.s32.totalorder %s39, 0
      %s42 = sadd.s32 %s41, 1
      %s43 = scalar_select %p40, %s41, %s42
      %p46 = pneg %p40
      %p47 = scmp.eq.s32.totalorder %s17, 1
      %p48 = por %p46, %p47
      %p49 = scmp.ne.s32.totalorder %s41, %s44
      %p50 = scmp.eq.s32.totalorder %s17, 0
      %p51 = por %p49, %p50
      %p52 = scmp.ne.s32.totalorder %s41, %s44
      %p53 = scmp.eq.s32.totalorder %s22, 1
      %p54 = por %p52, %p53
      %p55 = scmp.ne.s32.totalorder %s44, %s45
      %p56 = scmp.eq.s32.totalorder %s22, 0
      %p57 = por %p55, %p56
      %p58 = scmp.ne.s32.totalorder %s44, %s45
      %p59 = scmp.eq.s32.totalorder %s23, 1
      %p60 = por %p58, %p59
      %p62 = scmp.ne.s32.totalorder %s45, %s61
      %p63 = scmp.eq.s32.totalorder %s23, 0
      %p64 = por %p62, %p63
      %s65 = ssub.s32 %s24, %s36
      %s66 = ssub.s32 %s25, %s32
      %s67 = sor.u32 %s65, %s66
      %p68 = scmp.eq.s32.totalorder %s67, 0
      %s70 = sadd.s32 %s69, 1
      %s71 = scalar_select %p68, %s69, %s70
      %p74 = pneg %p68
      %p75 = scmp.eq.s32.totalorder %s17, 1
      %p76 = por %p74, %p75
      %p77 = scmp.ne.s32.totalorder %s69, %s72
      %p78 = scmp.eq.s32.totalorder %s17, 0
      %p79 = por %p77, %p78
      %p80 = scmp.ne.s32.totalorder %s69, %s72
      %p81 = scmp.eq.s32.totalorder %s22, 1
      %p82 = por %p80, %p81
      %p83 = scmp.ne.s32.totalorder %s72, %s73
      %p84 = scmp.eq.s32.totalorder %s22, 0
      %p85 = por %p83, %p84
      %p86 = scmp.ne.s32.totalorder %s72, %s73
      %p87 = scmp.eq.s32.totalorder %s23, 1
      %p88 = por %p86, %p87
      %p90 = scmp.ne.s32.totalorder %s73, %s89
      %p91 = scmp.eq.s32.totalorder %s23, 0
      %p92 = por %p90, %p91
      %s93 = ssub.s32 %s24, %s36
      %p94 = scmp.eq.s32.totalorder %s93, 0
      %s96 = sadd.s32 %s95, 1
      %s97 = scalar_select %p94, %s95, %s96
      %p100 = pneg %p94
      %p101 = scmp.eq.s32.totalorder %s17, 1
      %p102 = por %p100, %p101
      %p103 = scmp.ne.s32.totalorder %s95, %s98
      %p104 = scmp.eq.s32.totalorder %s17, 0
      %p105 = por %p103, %p104
      %p106 = scmp.ne.s32.totalorder %s95, %s98
      %p107 = scmp.eq.s32.totalorder %s22, 1
      %p108 = por %p106, %p107
      %p109 = scmp.ne.s32.totalorder %s98, %s99
      %p110 = scmp.eq.s32.totalorder %s22, 0
      %p111 = por %p109, %p110
      %p112 = scmp.ne.s32.totalorder %s98, %s99
      %p113 = scmp.eq.s32.totalorder %s23, 1
      %p114 = por %p112, %p113
      %p116 = scmp.ne.s32.totalorder %s99, %s115
      %p117 = scmp.eq.s32.totalorder %s23, 0
      %p118 = por %p116, %p117
      %p119 = scmp.le.s32.totalorder 1, %s17
      %p120 = scmp.lt.s32.totalorder %s17, 3
      %p121 = pnand %p119, %p120
      %p122 = pneg %p121
      // Predicated region
      $region9: #{tpu_custom_call.1} parent=5 // pred_check
        _
      $region10: #{tpu_custom_call.1} parent=5 // pred_check_branch
        %124 = sbr.rel (%p121) target = $region12
      $region11: #{tpu_custom_call.1} parent=5 // pred_region
        %s125 = ssub.s32 %s17, 1
      $region12: #{tpu_custom_call.1} parent=5 // pred_fallthru
        _
      %p126 = scmp.lt.s32.totalorder %s17, 2
      // Predicated region
      $region13: #{tpu_custom_call.1} parent=5 // pred_check
        %p127 = pneg %p126
      $region14: #{tpu_custom_call.1} parent=5 // pred_check_branch
        %129 = sbr.rel (%p127) target = $region16
      $region15: #{tpu_custom_call.1} parent=5 // pred_region
        // Predicated region
        $region17: #{tpu_custom_call.1} parent=15 // pred_check
          %p130 = pneg %p51
        $region18: #{tpu_custom_call.1} parent=15 // pred_check_branch
          %132 = sbr.rel (%p130) target = $region20
        $region19: #{tpu_custom_call.1} parent=15 // pred_region
          %s133 = sand.u32 %s41, 1
          %s134 = scalar_lea.sflag [#allocation3], %s133
          %s135 = sand.u32 %s41, 1
          %s136 = smul.addr %s135, 4
          %s137 = scalar_lea.vmem [#allocation2], %s136
          %s139 = ssub.s32 64, 64
          %140 = vsyncadd %s134, %s139
          %s141 = sadd.s32 %s25, %s24
          %s142 = smul.addr %s141, 64
          %s143 = scalar_lea.hbm %s0, %s142
          %s145 = sshll.u32 %s137, 4
          %s146 = int_to_ptr.vmem [resolvable:$true] %s145
          %148 = dma.hbm_to_vmem [thread:$0]  %s143, 64, %s146, %s134
        $region20: #{tpu_custom_call.1} parent=15 // pred_fallthru
          _
        // Predicated region
        $region21: #{tpu_custom_call.1} parent=15 // pred_check
          %p149 = pneg %p79
        $region22: #{tpu_custom_call.1} parent=15 // pred_check_branch
          %151 = sbr.rel (%p149) target = $region24
        $region23: #{tpu_custom_call.1} parent=15 // pred_region
          %s152 = sand.u32 %s69, 1
          %s153 = scalar_lea.sflag [#allocation6], %s152
          %s154 = sand.u32 %s69, 1
          %s155 = smul.addr %s154, 8
          %s156 = scalar_lea.vmem [#allocation5], %s155
          %s158 = ssub.s32 128, 128
          %159 = vsyncadd %s153, %s158
          %s160 = sadd.s32 %s25, %s24
          %s161 = smul.addr %s160, 128
          %s162 = scalar_lea.hbm %s1, %s161
          %s164 = sshll.u32 %s156, 4
          %s165 = int_to_ptr.vmem [resolvable:$true] %s164
          %167 = dma.hbm_to_vmem [thread:$0]  %s162, 128, %s165, %s153
        $region24: #{tpu_custom_call.1} parent=15 // pred_fallthru
          _
      $region16: #{tpu_custom_call.1} parent=5 // pred_fallthru
        _
      %p168 = scmp.le.s32.totalorder 1, %s17
      %p169 = scmp.lt.s32.totalorder %s17, 3
      %p170 = pnand %p168, %p169
      %p171 = pneg %p170
      // Predicated region
      $region25: #{tpu_custom_call.1} parent=5 // pred_check
        _
      $region26: #{tpu_custom_call.1} parent=5 // pred_check_branch
        %173 = sbr.rel (%p170) target = $region28
      $region27: #{tpu_custom_call.1} parent=5 // pred_region
        %s174 = ssub.s32 %s17, 1
        %s175 = sand.u32 %s44, 1
        %s176 = scalar_lea.sflag [#allocation3], %s175
        %s177 = sand.u32 %s44, 1
        %s178 = smul.addr %s177, 4
        %s179 = scalar_lea.vmem [#allocation2], %s178
        // Predicated region
        $region29: #{tpu_custom_call.1} parent=27 // pred_check
          %p180 = pneg %p57
        $region30: #{tpu_custom_call.1} parent=27 // pred_check_branch
          %182 = sbr.rel (%p180) target = $region32
        $region31: #{tpu_custom_call.1} parent=27 // pred_region
          %183 = dma.done %s176, 64
        $region32: #{tpu_custom_call.1} parent=27 // pred_fallthru
          _
        %s184 = sand.u32 %s72, 1
        %s185 = scalar_lea.sflag [#allocation6], %s184
        %s186 = sand.u32 %s72, 1
        %s187 = smul.addr %s186, 8
        %s188 = scalar_lea.vmem [#allocation5], %s187
        // Predicated region
        $region33: #{tpu_custom_call.1} parent=27 // pred_check
          %p189 = pneg %p85
        $region34: #{tpu_custom_call.1} parent=27 // pred_check_branch
          %191 = sbr.rel (%p189) target = $region36
        $region35: #{tpu_custom_call.1} parent=27 // pred_region
          %192 = dma.done %s185, 128
        $region36: #{tpu_custom_call.1} parent=27 // pred_fallthru
          _
        %s193 = sand.u32 %s44, 1
        %s194 = scalar_lea.sflag [#allocation3], %s193
        %s195 = sand.u32 %s44, 1
        %s196 = smul.addr %s195, 4
        %s197 = scalar_lea.vmem [#allocation2], %s196
        %p198 = pneg %p57
        %p199 = pneg %p54
        %s200 = sand.u32 %s72, 1
        %s201 = scalar_lea.sflag [#allocation6], %s200
        %s202 = sand.u32 %s72, 1
        %s203 = smul.addr %s202, 8
        %s204 = scalar_lea.vmem [#allocation5], %s203
        %p205 = pneg %p85
        %p206 = pneg %p82
        %p207 = pneg %p111
        %p208 = pneg %p108
        %s209 = sand.u32 %s98, 1
        %s210 = scalar_lea.sflag [#allocation4], %s209
        %s211 = sand.u32 %s98, 1
        %s212 = smul.addr %s211, 4
        %s213 = scalar_lea.vmem [#allocation7], %s212
        %p214 = scmp.eq.s32.totalorder %s27, 0
        // Predicated region
        $region37: #{tpu_custom_call.1} parent=27 // pred_check
          %p215 = pneg %p214
        $region38: #{tpu_custom_call.1} parent=27 // pred_check_branch
          %217 = sbr.rel (%p215) target = $region40
        $region39: #{tpu_custom_call.1} parent=27 // pred_region
          %vm218 = vcmask 257024
          %219 = vst.msk [vmem:[%s213] sm:$0xf] %vm218, 0.0
        $region40: #{tpu_custom_call.1} parent=27 // pred_fallthru
          _
        %v220 = vld [vmem:[%s213] sm:$0xf]
        %v221 = vld [vmem:[%s179] sm:$0xf]
        %v222 = vld [vmem:[%s188] sm:$0xff]
        %vm223 = vcmask 64512
        %v225 = vsel %vm223, %v221, 0
        %227 = vmatprep.subr.mxu0 0.0
        %228 = vmatpush1.msra.mxu0 %v222
        %229 = vmatprep.subr.mxu0 0.0
        %230 = vmatpush1.msra.mxu0 0.0
        %231 = vmatprep.subr.mxu0 0.0
        %232 = vmatpush1.msra.mxu0 0.0
        %233 = vmatprep.subr.mxu0 0.0
        %234 = vmatpush1.msra.mxu0 0.0
        %235 = vmatprep.subr.mxu0 0.0
        %236 = vmatpush1.msra.mxu0 0.0
        %237 = vmatprep.subr.mxu0 0.0
        %238 = vmatpush1.msra.mxu0 0.0
        %239 = vmatprep.subr.mxu0 0.0
        %240 = vmatpush1.msra.mxu0 0.0
        %241 = vmatprep.subr.mxu0 0.0
        %242 = vmatpush1.msra.mxu0 0.0
        %243 = vmatprep.subr.mxu0 0.0
        %244 = vmatpush1.msra.mxu0 0.0
        %245 = vmatprep.subr.mxu0 0.0
        %246 = vmatpush1.msra.mxu0 0.0
        %247 = vmatprep.subr.mxu0 0.0
        %248 = vmatpush1.msra.mxu0 0.0
        %249 = vmatprep.subr.mxu0 0.0
        %250 = vmatpush1.msra.mxu0 0.0
        %251 = vmatprep.subr.mxu0 0.0
        %252 = vmatpush1.msra.mxu0 0.0
        %253 = vmatprep.subr.mxu0 0.0
        %254 = vmatpush1.msra.mxu0 0.0
        %255 = vmatprep.subr.mxu0 0.0
        %256 = vmatpush1.msra.mxu0 0.0
        %257 = vmatprep.subr.mxu0 0.0
        %258 = vmatpush1.msra.mxu0 0.0
        %259 = vmatprep.subr.mxu0 0.0
        %260 = vmatpush1.msra.mxu0 0.0
        %261 = vmatprep.subr.mxu0 0.0
        %262 = vmatpush1.msra.mxu0 0.0
        %263 = vmatprep.subr.mxu0 0.0
        %264 = vmatpush1.msra.mxu0 0.0
        %265 = vmatprep.subr.mxu0 0.0
        %266 = vmatpush1.msra.mxu0 0.0
        %267 = vmatprep.subr.mxu0 0.0
        %268 = vmatpush1.msra.mxu0 0.0
        %269 = vmatprep.subr.mxu0 0.0
        %270 = vmatpush1.msra.mxu0 0.0
        %271 = vmatprep.subr.mxu0 0.0
        %272 = vmatpush1.msra.mxu0 0.0
        %273 = vmatprep.subr.mxu0 0.0
        %274 = vmatpush1.msra.mxu0 0.0
        %275 = vmatprep.subr.mxu0 0.0
        %276 = vmatpush1.msra.mxu0 0.0
        %277 = vmatprep.subr.mxu0 0.0
        %278 = vmatpush1.msra.mxu0 0.0
        %279 = vmatprep.subr.mxu0 0.0
        %280 = vmatpush1.msra.mxu0 0.0
        %281 = vmatprep.subr.mxu0 0.0
        %282 = vmatpush1.msra.mxu0 0.0
        %283 = vmatprep.subr.mxu0 0.0
        %284 = vmatpush1.msra.mxu0 0.0
        %285 = vmatprep.subr.mxu0 0.0
        %286 = vmatpush1.msra.mxu0 0.0
        %287 = vmatprep.subr.mxu0 0.0
        %288 = vmatpush1.msra.mxu0 0.0
        %289 = vmatprep.subr.mxu0 0.0
        %290 = vmatpush1.msra.mxu0 0.0
        %291 = vmatprep.mubr.f32.mxu0 0.0
        %292 = vmatmul.mubr.f32.gmra.mrb[0].mxu0 %v225
        %v293 = vpop.f32.mrb[0].mxu0
        %v294 = vadd.f32 0.0, %v293
        %v295 = vpop.f32.mrb[0].mxu0
        %296 = vdwg.mxu0
        %v297 = vadd.f32 %v220, %v294
        %vm298 = vcmask 257024
        %299 = vst.msk [vmem:[%s213] sm:$0xf] %vm298, %v297
        // Predicated region
        $region41: #{tpu_custom_call.1} parent=27 // pred_check
          %p300 = pneg %p214
        $region42: #{tpu_custom_call.1} parent=27 // pred_check_branch
          %302 = sbr.rel (%p300) target = $region44
        $region43: #{tpu_custom_call.1} parent=27 // pred_region
          %v303 = vld [vmem:[%s213 + $0x1] sm:$0x1]
          %v304 = vld [vmem:[%s213 + $0x2] sm:$0x1]
          %v305 = vmul.f32 %v303, %v304
          %vm306 = vcmask 253952
          %307 = vst.msk [vmem:[%s213 + $0x3] sm:$0x1] %vm306, %v305
        $region44: #{tpu_custom_call.1} parent=27 // pred_fallthru
          _
        %s308 = sand.u32 %s98, 1
        %s309 = scalar_lea.sflag [#allocation4], %s308
        %s310 = sand.u32 %s98, 1
        %s311 = smul.addr %s310, 4
        %s312 = scalar_lea.vmem [#allocation7], %s311
        // Predicated region
        $region45: #{tpu_custom_call.1} parent=27 // pred_check
          %p313 = pneg %p108
        $region46: #{tpu_custom_call.1} parent=27 // pred_check_branch
          %315 = sbr.rel (%p313) target = $region48
        $region47: #{tpu_custom_call.1} parent=27 // pred_region
          %s317 = ssub.s32 64, 64
          %318 = vsyncadd %s309, %s317
          %s319 = smul.addr %s26, 64
          %s320 = scalar_lea.hbm %s2, %s319
          %s322 = sshll.u32 %s312, 4
          %s323 = int_to_ptr.vmem [resolvable:$true] %s322
          %325 = dma.vmem_to_hbm [thread:$0]  %s323, 64, %s320, %s309
        $region48: #{tpu_custom_call.1} parent=27 // pred_fallthru
          _
      $region28: #{tpu_custom_call.1} parent=5 // pred_fallthru
        _
      %p326 = scmp.le.s32.totalorder 2, %s17
      // Predicated region
      $region49: #{tpu_custom_call.1} parent=5 // pred_check
        %p327 = pneg %p326
      $region50: #{tpu_custom_call.1} parent=5 // pred_check_branch
        %329 = sbr.rel (%p327) target = $region52
      $region51: #{tpu_custom_call.1} parent=5 // pred_region
        %s330 = ssub.s32 %s17, 2
        // Predicated region
        $region53: #{tpu_custom_call.1} parent=51 // pred_check
          %p331 = pneg %p114
        $region54: #{tpu_custom_call.1} parent=51 // pred_check_branch
          %333 = sbr.rel (%p331) target = $region56
        $region55: #{tpu_custom_call.1} parent=51 // pred_region
          %s334 = sand.u32 %s99, 1
          %s335 = scalar_lea.sflag [#allocation4], %s334
          %s336 = sand.u32 %s99, 1
          %s337 = smul.addr %s336, 4
          %s338 = scalar_lea.vmem [#allocation7], %s337
          %339 = dma.done %s335, 64
        $region56: #{tpu_custom_call.1} parent=51 // pred_fallthru
          _
      $region52: #{tpu_custom_call.1} parent=5 // pred_fallthru
        _
    $region6: #{tpu_custom_call.1} parent=1 // loop_footer
      %s21 = sadd.s32 1, %s17
    $region7: #{tpu_custom_call.1} parent=1 // loop_footer_branch
      %16 = sbr.rel target = $region3
    $region8: #{tpu_custom_call.1} parent=1 // loop_exit
      _
    %340 = vsyncpa [#allocation3], 1
    %s341 = scalar_lea.sflag [#allocation3], 1
    %342 = vsyncpa %s341, 1
    %343 = vsyncpa [#allocation6], 1
    %s344 = scalar_lea.sflag [#allocation6], 1
    %345 = vsyncpa %s344, 1
    %346 = vsyncpa [#allocation4], 1
    %s347 = scalar_lea.sflag [#allocation4], 1
    %348 = vsyncpa %s347, 1

</llo_original>
